<compile_context>
chip_gen: v5e
topology: v5e:2x2
jax: 0.10.0
libtpu: 0.0.40
codegen_flags: <defaults>
</compile_context>

<pallas_src>
import functools

import jax
import jax.numpy as jnp
from jax.experimental import pallas as pl
from jax.experimental.pallas import tpu as pltpu


def _adap_pz_kernel(ypcol_ref, rows_ref, wgt_ref, state_ref, sums_ref, acc_ref,
                    *, margin, gamma, eps, inv_b):
    """Grid: (i over anchor/lane tiles [parallel], j over comparison tiles [arbitrary]).

    rows_ref (6, ti): [y_pred; y_pred_adv; pos; valid; u_all_gathered; u_pos_gathered]
    wgt_ref  (2, tj): [valid; pos] restricted to the j block (bf16).
    acc_ref  (2, ti): acc[0] = sum_j valid[j]*sur[i,j], acc[1] = sum_j pos[j]*sur[i,j].
    """
    j = pl.program_id(1)

    @pl.when(j == 0)
    def _init():
        acc_ref[...] = jnp.zeros_like(acc_ref)

    # S[a, l] = sur[i_tile+l, j_tile+a] = max(margin - (yp[i] - yp[a]), 0)^2
    diff = margin - (rows_ref[0:1, :] - ypcol_ref[...])        # (tj, ti) f32
    s = jnp.maximum(diff, 0.0)
    s = s * s

    # Weighted reductions over the comparison axis ride the MXU; bf16 operands
    # (single MXU pass), f32 accumulation.
    acc_ref[...] += jnp.dot(wgt_ref[...], s.astype(jnp.bfloat16),
                            preferred_element_type=jnp.float32)  # (2, ti)

    @pl.when(j == pl.num_programs(1) - 1)
    def _finalize():
        yp = rows_ref[0:1, :]
        ya = rows_ref[1:2, :]
        pos = rows_ref[2:3, :]
        valid = rows_ref[3:4, :]
        uall_g = rows_ref[4:5, :]
        upos_g = rows_ref[5:6, :]
        sum_all = acc_ref[0:1, :]
        sum_pos = acc_ref[1:2, :]

        # Moving-average state updates (mean over the ORIGINAL batch size B).
        uall_new = (1.0 - gamma) * uall_g + gamma * (sum_all * inv_b)
        upos_new = (1.0 - gamma) * upos_g + gamma * (sum_pos * inv_b)
        # Direct sublane stores (no concatenate temporaries).
        state_ref[0:1, :] = uall_new
        state_ref[1:2, :] = upos_new

        # Collapsed nat-loss contribution per positive anchor i:
        #   sum_j p[i,j]*sur[i,j]
        #     = pos[i] * (upos_new[i]*sum_all[i] - uall_new[i]*sum_pos[i]) / uall_new[i]^2
        # Exact divide: only a (1, ti) row, once per i-tile.
        denom = jnp.maximum(uall_new * uall_new, 1e-30)
        nat_row = pos * (upos_new * sum_all - uall_new * sum_pos) / denom

        # KL(y_prob || y_prob_adv) pointwise terms, log-difference form
        # (no divides; xlogy-style guard so y_pred exactly 0/1 cannot NaN).
        t0 = yp
        t1 = 1.0 - yp
        safe0 = jnp.where(t0 > 0.0, t0, 1.0)
        safe1 = jnp.where(t1 > 0.0, t1, 1.0)
        kl_row = (t0 * (jnp.log(safe0) - jnp.log(ya + eps)) +
                  t1 * (jnp.log(safe1) - jnp.log(1.0 - ya + eps))) * valid

        # In-kernel lane reductions (XLU) -> per-i-tile partial scalars packed
        # into lanes 0..2 of sublane 0 of the (8, 128) sums block.
        nat_p = jnp.sum(nat_row, axis=1, keepdims=True)    # (1, 1)
        kl_p = jnp.sum(kl_row, axis=1, keepdims=True)
        npos_p = jnp.sum(pos, axis=1, keepdims=True)
        lane = jax.lax.broadcasted_iota(jnp.int32, (1, 128), 1)
        row = (jnp.where(lane == 0, nat_p, 0.0) +
               jnp.where(lane == 1, kl_p, 0.0) +
               jnp.where(lane == 2, npos_p, 0.0))
        sums_ref[...] = jnp.zeros_like(sums_ref)
        sums_ref[0:1, :] = row


def _vmem_params():
    """Returns (f32 surrogate-tile byte budget, vmem_limit_bytes or None)."""
    kind = ""
    try:
        kind = jax.devices()[0].device_kind.lower()
    except Exception:
        pass
    if "v7" in kind:      # 64 MiB physical VMEM per TensorCore
        return 12 << 20, 48 << 20
    if "v6" in kind:      # 128 MiB physical
        return 16 << 20, 96 << 20
    if "v5" in kind:      # 128 MiB physical, small default scoped limit
        return 6 << 20, 64 << 20
    if "v4" in kind:      # 128 MiB physical
        return 12 << 20, 64 << 20
    return 4 << 20, None  # unknown / older: stay inside default scoped limit


def _choose_tiles(bp, tile_budget_bytes):
    """Pick (ti, tj): lane (anchor) tile and sublane (comparison) tile."""
    assert bp % 128 == 0
    # Lane tile: lane-dense, and >= 2 i-blocks once bp allows it so the
    # "parallel" i axis can be sharded across v7x's two TensorCores.
    if bp <= 128:
        ti = bp
    else:
        ti = min(2048, bp // 2)
        ti = max(128, (ti // 128) * 128)
        while bp % ti:
            ti -= 128
    # Sublane tile: as large as the f32 (tj, ti) surrogate tile budget allows.
    tj = min(bp, max(128, (tile_budget_bytes // (ti * 4)) // 128 * 128))
    while bp % tj:
        tj -= 128
    tile_bytes = ti * tj * 4
    assert ti >= 128 and tj >= 128 and bp % ti == 0 and bp % tj == 0
    assert tile_bytes <= max(tile_budget_bytes, 128 * 128 * 4), (
        "surrogate tile exceeds VMEM budget", ti, tj, tile_bytes)
    return ti, tj


def _run_kernel(yp_col, rows, wgt, *, margin, gamma, eps, batch_size):
    f32 = jnp.float32
    bp = rows.shape[1]
    tile_budget, vmem_limit = _vmem_params()
    ti, tj = _choose_tiles(bp, tile_budget)
    n_i, n_j = bp // ti, bp // tj

    kernel = functools.partial(
        _adap_pz_kernel, margin=float(margin), gamma=float(gamma),
        eps=float(eps), inv_b=1.0 / float(batch_size))

    state, sums = pl.pallas_call(
        kernel,
        out_shape=(jax.ShapeDtypeStruct((2, bp), f32),        # [u_all_new; u_pos_new]
                   jax.ShapeDtypeStruct((n_i * 8, 128), f32)),  # per-i-tile partial sums
        grid_spec=pltpu.PrefetchScalarGridSpec(
            num_scalar_prefetch=0,
            grid=(n_i, n_j),
            in_specs=[
                # y_pred column block (comparison axis) — only per-j-step DMA.
                pl.BlockSpec((tj, 1), lambda i, j: (j, 0)),
                # packed per-anchor rows, re-fetched only when i changes.
                pl.BlockSpec((6, ti), lambda i, j: (0, i)),
                # [valid; pos] weights for this j block (bf16).
                pl.BlockSpec((2, tj), lambda i, j: (0, j)),
            ],
            out_specs=[
                pl.BlockSpec((2, ti), lambda i, j: (0, i)),
                pl.BlockSpec((8, 128), lambda i, j: (i, 0)),
            ],
            scratch_shapes=[pltpu.VMEM((2, ti), f32)],
        ),
        compiler_params=pltpu.CompilerParams(
            dimension_semantics=("parallel", "arbitrary"),
            vmem_limit_bytes=vmem_limit),
    )(yp_col, rows, wgt)
    return state, sums


def adap_pz_forward(y_pred, y_pred_adv, y_true, index_s, u_all, u_pos,
                    *, margin, gamma, Lambda, eps=1e-12):
    """Functional equivalent of AdAP_PZ.forward; returns (loss, new_u_all, new_u_pos)."""
    f32 = jnp.float32
    B = y_pred.shape[0]

    yt = jnp.squeeze(y_true).reshape(-1)
    pos = (yt == 1).astype(f32)                                  # (B,)
    idx = index_s.reshape(-1).astype(jnp.int32)                  # (B,)

    # TODO(synk): fusing this gather/scatter into the pallas_call (scalar-prefetch
    # index_s + input_output_aliases on u_all/u_pos) would save a few small XLA
    # launches per step; kept as plain XLA gather/scatter here for robustness.
    uall_g = u_all[idx, 0].astype(f32)                           # (B,)
    upos_g = u_pos[idx, 0].astype(f32)

    # Pad the batch to a multiple of 128 lanes; validity folded into the masks.
    bp = ((B + 127) // 128) * 128
    pad = bp - B
    yp = jnp.pad(y_pred.reshape(-1).astype(f32), (0, pad))
    ya = jnp.pad(y_pred_adv.reshape(-1).astype(f32), (0, pad))
    pos_p = jnp.pad(pos, (0, pad))
    valid = jnp.pad(jnp.ones((B,), f32), (0, pad))
    rows = jnp.stack([yp, ya, pos_p, valid,
                      jnp.pad(uall_g, (0, pad)),
                      jnp.pad(upos_g, (0, pad))], axis=0)        # (6, bp) f32
    wgt = jnp.stack([valid, pos_p], axis=0).astype(jnp.bfloat16)  # (2, bp) bf16

    state, sums = _run_kernel(yp.reshape(bp, 1), rows, wgt,
                              margin=margin, gamma=gamma, eps=eps, batch_size=B)

    # Per-i-tile partials reduced in-kernel; only a tiny fused combine remains.
    n_i = sums.shape[0] // 8
    sums3 = sums.reshape(n_i, 8, 128)
    nat_sum = jnp.sum(sums3[:, 0, 0])
    kl_sum = jnp.sum(sums3[:, 0, 1])
    num_pos = jnp.sum(sums3[:, 0, 2])

    # Guarded: reference produces NaN for a batch with no positives; here the
    # nat term is exactly 0 in that case.
    nat_loss = nat_sum / (jnp.maximum(num_pos, 1.0) * B)
    adv_loss = kl_sum / B                                        # KLDivLoss batchmean
    loss = nat_loss + Lambda * adv_loss

    # Scatter updated state back (only positive anchors change, as in torch).
    # TODO(synk): duplicate entries in index_s (last-write-wins in PyTorch
    # advanced indexing) are assumed not to occur (dataset indices are unique).
    uall_new = state[0, :B]
    upos_new = state[1, :B]
    uall_vals = jnp.where(pos > 0, uall_new, uall_g)
    upos_vals = jnp.where(pos > 0, upos_new, upos_g)
    new_u_all = u_all.at[idx, 0].set(uall_vals.astype(u_all.dtype))
    new_u_pos = u_pos.at[idx, 0].set(upos_vals.astype(u_pos.dtype))

    return loss, new_u_all, new_u_pos


def _reference_forward(y_pred, y_pred_adv, y_true, index_s, u_all, u_pos,
                       *, margin, gamma, Lambda, eps):
    """Pure-JAX (eager) transcription of the PyTorch module, for checking."""
    yt = jnp.squeeze(y_true)
    posm = yt == 1
    yp = y_pred.reshape(-1)
    f_ps = yp[posm].reshape(-1, 1)
    idx_ps = index_s.reshape(-1)[posm]
    mat = jnp.tile(yp.reshape(1, -1), (f_ps.shape[0], 1))
    pos_mask = posm.reshape(-1).astype(jnp.float32)
    sur = jnp.maximum(margin - (f_ps - mat), 0.0) ** 2
    pos_sur = sur * pos_mask
    u_all_rows = (1 - gamma) * u_all[idx_ps] + gamma * sur.mean(1, keepdims=True)
    u_pos_rows = (1 - gamma) * u_pos[idx_ps] + gamma * pos_sur.mean(1, keepdims=True)
    new_u_all = u_all.at[idx_ps].set(u_all_rows)
    new_u_pos = u_pos.at[idx_ps].set(u_pos_rows)
    p = (u_pos_rows - u_all_rows * pos_mask) / (u_all_rows ** 2)
    nat_loss = jnp.mean(p * sur)
    y_prob = jnp.concatenate([y_pred, 1 - y_pred], axis=-1)
    y_prob_adv = jnp.concatenate([y_pred_adv, 1 - y_pred_adv], axis=-1)
    kl = y_prob * (jnp.log(y_prob) - jnp.log(y_prob_adv + eps))
    adv_loss = jnp.sum(kl) / y_prob.shape[0]
    return nat_loss + Lambda * adv_loss, new_u_all, new_u_pos


if __name__ == "__main__":
    key = jax.random.PRNGKey(0)
    B = 16
    data_length = 64
    margin, gamma, Lambda = 1.0, 0.9, 1.0

    k1, k2, k3, k4 = jax.random.split(key, 4)
    y_pred = jax.nn.sigmoid(jax.random.normal(k1, (B, 1), jnp.float32))
    y_pred_adv = jax.nn.sigmoid(jax.random.normal(k2, (B, 1), jnp.float32))
    y_true = (jax.random.uniform(k3, (B, 1)) > 0.5).astype(jnp.float32)
    y_true = y_true.at[0, 0].set(1.0)          # ensure at least one positive
    index_s = jax.random.permutation(k4, data_length)[:B].astype(jnp.int32)

    u_all = jnp.zeros((data_length, 1), jnp.float32)
    u_pos = jnp.zeros((data_length, 1), jnp.float32)

    loss, new_u_all, new_u_pos = adap_pz_forward(
        y_pred, y_pred_adv, y_true, index_s, u_all, u_pos,
        margin=margin, gamma=gamma, Lambda=Lambda)
    jax.block_until_ready((loss, new_u_all, new_u_pos))

    ref_loss, ref_u_all, ref_u_pos = _reference_forward(
        y_pred, y_pred_adv, y_true, index_s, u_all, u_pos,
        margin=margin, gamma=gamma, Lambda=Lambda, eps=1e-12)

    assert jnp.isfinite(loss), "loss is not finite"
    assert jnp.allclose(loss, ref_loss, rtol=5e-2, atol=5e-2), (loss, ref_loss)
    assert jnp.allclose(new_u_all, ref_u_all, rtol=5e-2, atol=2e-3)
    assert jnp.allclose(new_u_pos, ref_u_pos, rtol=5e-2, atol=2e-3)
    print("KERNEL_OK")
</pallas_src>

<mosaic_0001>
module attributes {stable_mosaic.version = 11 : i64} {
  func.func @_adap_pz_kernel(%arg0: i32, %arg1: i32, %arg2: memref<128x1xf32, #tpu.memory_space<vmem>>, %arg3: memref<6x128xf32, #tpu.memory_space<vmem>>, %arg4: memref<2x128xbf16, #tpu.memory_space<vmem>>, %arg5: memref<2x128xf32, #tpu.memory_space<vmem>>, %arg6: memref<8x128xf32, #tpu.memory_space<vmem>>, %arg7: memref<2x128xf32, #tpu.memory_space<vmem>>) attributes {dimension_semantics = [#tpu.dimension_semantics<parallel>, #tpu.dimension_semantics<arbitrary>], iteration_bounds = array<i64: 1, 1>, scalar_prefetch = 0 : i64, scratch_operands = 1 : i64, tpu.core_type = #tpu.core_type<tc>, window_params = [{transform_indices = @transform_0, window_bounds = array<i64: 128, 1>}, {transform_indices = @transform_1, window_bounds = array<i64: 6, 128>}, {transform_indices = @transform_2, window_bounds = array<i64: 2, 128>}, {transform_indices = @transform_3, window_bounds = array<i64: 2, 128>}, {transform_indices = @transform_4, window_bounds = array<i64: 8, 128>}]} {
    %c0_i32 = arith.constant 0 : i32
    %0 = arith.cmpi eq, %arg1, %c0_i32 : i32
    %1 = arith.extui %0 : i1 to i32
    %c0_i32_0 = arith.constant 0 : i32
    %2 = arith.cmpi ne, %1, %c0_i32_0 : i32
    scf.if %2 {
      %cst_14 = arith.constant 0.000000e+00 : f32
      %22 = vector.broadcast %cst_14 : f32 to vector<2x128xf32>
      %c0_15 = arith.constant 0 : index
      %c0_16 = arith.constant 0 : index
      %23 = vector.load %arg7[%c0_15, %c0_16] : memref<2x128xf32, #tpu.memory_space<vmem>>, vector<2x128xf32>
      tpu.vector_store %arg7[%c0_15, %c0_16], %22 {strides = array<i32>} : memref<2x128xf32, #tpu.memory_space<vmem>>, vector<2x128xf32>,
    } else {
    }
    %c0 = arith.constant 0 : index
    %c0_1 = arith.constant 0 : index
    %3 = vector.load %arg3[%c0, %c0_1] : memref<6x128xf32, #tpu.memory_space<vmem>>, vector<1x128xf32>
    %c0_2 = arith.constant 0 : index
    %c0_3 = arith.constant 0 : index
    %4 = vector.load %arg2[%c0_2, %c0_3] : memref<128x1xf32, #tpu.memory_space<vmem>>, vector<128x1xf32>
    %5 = vector.broadcast %3 : vector<1x128xf32> to vector<128x128xf32>
    %6 = vector.broadcast %4 : vector<128x1xf32> to vector<128x128xf32>
    %7 = arith.subf %5, %6 : vector<128x128xf32>
    %cst = arith.constant 1.000000e+00 : f32
    %8 = vector.broadcast %cst : f32 to vector<128x128xf32>
    %9 = arith.subf %8, %7 : vector<128x128xf32>
    %cst_4 = arith.constant 0.000000e+00 : f32
    %10 = vector.broadcast %cst_4 : f32 to vector<128x128xf32>
    %11 = arith.maximumf %9, %10 : vector<128x128xf32>
    %12 = arith.mulf %11, %11 : vector<128x128xf32>
    %c0_5 = arith.constant 0 : index
    %c0_6 = arith.constant 0 : index
    %13 = vector.load %arg7[%c0_5, %c0_6] : memref<2x128xf32, #tpu.memory_space<vmem>>, vector<2x128xf32>
    %c0_7 = arith.constant 0 : index
    %c0_8 = arith.constant 0 : index
    %14 = vector.load %arg4[%c0_7, %c0_8] : memref<2x128xbf16, #tpu.memory_space<vmem>>, vector<2x128xbf16>
    %15 = arith.truncf %12 : vector<128x128xf32> to vector<128x128xbf16>
    %cst_9 = arith.constant dense<0.000000e+00> : vector<2x128xf32>
    %16 = tpu.matmul %14, %15, %cst_9 {dimension_numbers = #tpu.dot_dimension_numbers<[1], [0], [0], [1], [0, 0, 1, 1], [], []>} : vector<2x128xbf16>, vector<128x128xbf16>, vector<2x128xf32> -> vector<2x128xf32>
    %17 = arith.addf %13, %16 : vector<2x128xf32>
    %c0_10 = arith.constant 0 : index
    %c0_11 = arith.constant 0 : index
    %18 = vector.load %arg7[%c0_10, %c0_11] : memref<2x128xf32, #tpu.memory_space<vmem>>, vector<2x128xf32>
    tpu.vector_store %arg7[%c0_10, %c0_11], %17 {strides = array<i32>} : memref<2x128xf32, #tpu.memory_space<vmem>>, vector<2x128xf32>,
    %c0_i32_12 = arith.constant 0 : i32
    %19 = arith.cmpi eq, %arg1, %c0_i32_12 : i32
    %20 = arith.extui %19 : i1 to i32
    %c0_i32_13 = arith.constant 0 : i32
    %21 = arith.cmpi ne, %20, %c0_i32_13 : i32
    scf.if %21 {
      %c0_14 = arith.constant 0 : index
      %c0_15 = arith.constant 0 : index
      %22 = vector.load %arg3[%c0_14, %c0_15] : memref<6x128xf32, #tpu.memory_space<vmem>>, vector<1x128xf32>
      %c1 = arith.constant 1 : index
      %c0_16 = arith.constant 0 : index
      %23 = vector.load %arg3[%c1, %c0_16] : memref<6x128xf32, #tpu.memory_space<vmem>>, vector<1x128xf32>
      %c2 = arith.constant 2 : index
      %c0_17 = arith.constant 0 : index
      %24 = vector.load %arg3[%c2, %c0_17] : memref<6x128xf32, #tpu.memory_space<vmem>>, vector<1x128xf32>
      %c3 = arith.constant 3 : index
      %c0_18 = arith.constant 0 : index
      %25 = vector.load %arg3[%c3, %c0_18] : memref<6x128xf32, #tpu.memory_space<vmem>>, vector<1x128xf32>
      %c4 = arith.constant 4 : index
      %c0_19 = arith.constant 0 : index
      %26 = vector.load %arg3[%c4, %c0_19] : memref<6x128xf32, #tpu.memory_space<vmem>>, vector<1x128xf32>
      %c5 = arith.constant 5 : index
      %c0_20 = arith.constant 0 : index
      %27 = vector.load %arg3[%c5, %c0_20] : memref<6x128xf32, #tpu.memory_space<vmem>>, vector<1x128xf32>
      %c0_21 = arith.constant 0 : index
      %c0_22 = arith.constant 0 : index
      %28 = vector.load %arg7[%c0_21, %c0_22] : memref<2x128xf32, #tpu.memory_space<vmem>>, vector<1x128xf32>
      %c1_23 = arith.constant 1 : index
      %c0_24 = arith.constant 0 : index
      %29 = vector.load %arg7[%c1_23, %c0_24] : memref<2x128xf32, #tpu.memory_space<vmem>>, vector<1x128xf32>
      %cst_25 = arith.constant 1.000000e-01 : f32
      %30 = vector.broadcast %cst_25 : f32 to vector<1x128xf32>
      %31 = arith.mulf %30, %26 : vector<1x128xf32>
      %cst_26 = arith.constant 6.250000e-02 : f32
      %32 = vector.broadcast %cst_26 : f32 to vector<1x128xf32>
      %33 = arith.mulf %28, %32 : vector<1x128xf32>
      %cst_27 = arith.constant 0.899999976 : f32
      %34 = vector.broadcast %cst_27 : f32 to vector<1x128xf32>
      %35 = arith.mulf %34, %33 : vector<1x128xf32>
      %36 = arith.addf %31, %35 : vector<1x128xf32>
      %cst_28 = arith.constant 1.000000e-01 : f32
      %37 = vector.broadcast %cst_28 : f32 to vector<1x128xf32>
      %38 = arith.mulf %37, %27 : vector<1x128xf32>
      %cst_29 = arith.constant 6.250000e-02 : f32
      %39 = vector.broadcast %cst_29 : f32 to vector<1x128xf32>
      %40 = arith.mulf %29, %39 : vector<1x128xf32>
      %cst_30 = arith.constant 0.899999976 : f32
      %41 = vector.broadcast %cst_30 : f32 to vector<1x128xf32>
      %42 = arith.mulf %41, %40 : vector<1x128xf32>
      %43 = arith.addf %38, %42 : vector<1x128xf32>
      %c0_31 = arith.constant 0 : index
      %c0_32 = arith.constant 0 : index
      %44 = vector.load %arg5[%c0_31, %c0_32] : memref<2x128xf32, #tpu.memory_space<vmem>>, vector<1x128xf32>
      tpu.vector_store %arg5[%c0_31, %c0_32], %36 {strides = array<i32>} : memref<2x128xf32, #tpu.memory_space<vmem>>, vector<1x128xf32>,
      %c1_33 = arith.constant 1 : index
      %c0_34 = arith.constant 0 : index
      %45 = vector.load %arg5[%c1_33, %c0_34] : memref<2x128xf32, #tpu.memory_space<vmem>>, vector<1x128xf32>
      tpu.vector_store %arg5[%c1_33, %c0_34], %43 {strides = array<i32>} : memref<2x128xf32, #tpu.memory_space<vmem>>, vector<1x128xf32>,
      %46 = arith.mulf %36, %36 : vector<1x128xf32>
      %cst_35 = arith.constant 1.000000e-30 : f32
      %47 = vector.broadcast %cst_35 : f32 to vector<1x128xf32>
      %48 = arith.maximumf %46, %47 : vector<1x128xf32>
      %49 = arith.mulf %43, %28 : vector<1x128xf32>
      %50 = arith.mulf %36, %29 : vector<1x128xf32>
      %51 = arith.subf %49, %50 : vector<1x128xf32>
      %52 = arith.mulf %24, %51 : vector<1x128xf32>
      %53 = arith.divf %52, %48 : vector<1x128xf32>
      %cst_36 = arith.constant 1.000000e+00 : f32
      %54 = vector.broadcast %cst_36 : f32 to vector<1x128xf32>
      %55 = arith.subf %54, %22 : vector<1x128xf32>
      %cst_37 = arith.constant 0.000000e+00 : f32
      %56 = vector.broadcast %cst_37 : f32 to vector<1x128xf32>
      %57 = arith.cmpf ogt, %22, %56 : vector<1x128xf32>
      %cst_38 = arith.constant 1.000000e+00 : f32
      %58 = vector.broadcast %cst_38 : f32 to vector<1x128xf32>
      %59 = arith.select %57, %22, %58 : vector<1x128xi1>, vector<1x128xf32>
      %cst_39 = arith.constant 0.000000e+00 : f32
      %60 = vector.broadcast %cst_39 : f32 to vector<1x128xf32>
      %61 = arith.cmpf ogt, %55, %60 : vector<1x128xf32>
      %cst_40 = arith.constant 1.000000e+00 : f32
      %62 = vector.broadcast %cst_40 : f32 to vector<1x128xf32>
      %63 = arith.select %61, %55, %62 : vector<1x128xi1>, vector<1x128xf32>
      %64 = math.log %59 : vector<1x128xf32>
      %cst_41 = arith.constant 9.99999996E-13 : f32
      %65 = vector.broadcast %cst_41 : f32 to vector<1x128xf32>
      %66 = arith.addf %23, %65 : vector<1x128xf32>
      %67 = math.log %66 : vector<1x128xf32>
      %68 = arith.subf %64, %67 : vector<1x128xf32>
      %69 = arith.mulf %22, %68 : vector<1x128xf32>
      %70 = math.log %63 : vector<1x128xf32>
      %cst_42 = arith.constant 1.000000e+00 : f32
      %71 = vector.broadcast %cst_42 : f32 to vector<1x128xf32>
      %72 = arith.subf %71, %23 : vector<1x128xf32>
      %cst_43 = arith.constant 9.99999996E-13 : f32
      %73 = vector.broadcast %cst_43 : f32 to vector<1x128xf32>
      %74 = arith.addf %72, %73 : vector<1x128xf32>
      %75 = math.log %74 : vector<1x128xf32>
      %76 = arith.subf %70, %75 : vector<1x128xf32>
      %77 = arith.mulf %55, %76 : vector<1x128xf32>
      %78 = arith.addf %69, %77 : vector<1x128xf32>
      %79 = arith.mulf %78, %25 : vector<1x128xf32>
      %cst_44 = arith.constant dense<0.000000e+00> : vector<1xf32>
      %80 = vector.multi_reduction <add>, %53, %cst_44 [1] : vector<1x128xf32> to vector<1xf32>
      %81 = vector.shape_cast %80 : vector<1xf32> to vector<1x1xf32>
      %cst_45 = arith.constant dense<0.000000e+00> : vector<1xf32>
      %82 = vector.multi_reduction <add>, %79, %cst_45 [1] : vector<1x128xf32> to vector<1xf32>
      %83 = vector.shape_cast %82 : vector<1xf32> to vector<1x1xf32>
      %cst_46 = arith.constant dense<0.000000e+00> : vector<1xf32>
      %84 = vector.multi_reduction <add>, %24, %cst_46 [1] : vector<1x128xf32> to vector<1xf32>
      %85 = vector.shape_cast %84 : vector<1xf32> to vector<1x1xf32>
      %86 = tpu.iota {dimensions = array<i32: 1>} : vector<1x128xi32>
      %c0_i32_47 = arith.constant 0 : i32
      %87 = vector.broadcast %c0_i32_47 : i32 to vector<1x128xi32>
      %88 = arith.cmpi eq, %86, %87 : vector<1x128xi32>
      %cst_48 = arith.constant 0.000000e+00 : f32
      %89 = vector.shape_cast %81 : vector<1x1xf32> to vector<1x1xf32>
      %90 = vector.broadcast %89 : vector<1x1xf32> to vector<1x128xf32>
      %91 = vector.broadcast %cst_48 : f32 to vector<1x128xf32>
      %92 = arith.select %88, %90, %91 : vector<1x128xi1>, vector<1x128xf32>
      %c1_i32 = arith.constant 1 : i32
      %93 = vector.broadcast %c1_i32 : i32 to vector<1x128xi32>
      %94 = arith.cmpi eq, %86, %93 : vector<1x128xi32>
      %cst_49 = arith.constant 0.000000e+00 : f32
      %95 = vector.shape_cast %83 : vector<1x1xf32> to vector<1x1xf32>
      %96 = vector.broadcast %95 : vector<1x1xf32> to vector<1x128xf32>
      %97 = vector.broadcast %cst_49 : f32 to vector<1x128xf32>
      %98 = arith.select %94, %96, %97 : vector<1x128xi1>, vector<1x128xf32>
      %99 = arith.addf %92, %98 : vector<1x128xf32>
      %c2_i32 = arith.constant 2 : i32
      %100 = vector.broadcast %c2_i32 : i32 to vector<1x128xi32>
      %101 = arith.cmpi eq, %86, %100 : vector<1x128xi32>
      %cst_50 = arith.constant 0.000000e+00 : f32
      %102 = vector.shape_cast %85 : vector<1x1xf32> to vector<1x1xf32>
      %103 = vector.broadcast %102 : vector<1x1xf32> to vector<1x128xf32>
      %104 = vector.broadcast %cst_50 : f32 to vector<1x128xf32>
      %105 = arith.select %101, %103, %104 : vector<1x128xi1>, vector<1x128xf32>
      %106 = arith.addf %99, %105 : vector<1x128xf32>
      %cst_51 = arith.constant 0.000000e+00 : f32
      %107 = vector.broadcast %cst_51 : f32 to vector<8x128xf32>
      %c0_52 = arith.constant 0 : index
      %c0_53 = arith.constant 0 : index
      %108 = vector.load %arg6[%c0_52, %c0_53] : memref<8x128xf32, #tpu.memory_space<vmem>>, vector<8x128xf32>
      tpu.vector_store %arg6[%c0_52, %c0_53], %107 {strides = array<i32>} : memref<8x128xf32, #tpu.memory_space<vmem>>, vector<8x128xf32>,
      %c0_54 = arith.constant 0 : index
      %c0_55 = arith.constant 0 : index
      %109 = vector.load %arg6[%c0_54, %c0_55] : memref<8x128xf32, #tpu.memory_space<vmem>>, vector<1x128xf32>
      tpu.vector_store %arg6[%c0_54, %c0_55], %106 {strides = array<i32>} : memref<8x128xf32, #tpu.memory_space<vmem>>, vector<1x128xf32>,
    } else {
    }
    return
  }
  func.func @transform_0(%arg0: i32, %arg1: i32) -> (i32, i32) {
    %c0_i32 = arith.constant 0 : i32
    %c0_i32_0 = arith.constant 0 : i32
    return %arg1, %c0_i32 : i32, i32
  }
  func.func @transform_1(%arg0: i32, %arg1: i32) -> (i32, i32) {
    %c0_i32 = arith.constant 0 : i32
    %c0_i32_0 = arith.constant 0 : i32
    return %c0_i32, %arg0 : i32, i32
  }
  func.func @transform_2(%arg0: i32, %arg1: i32) -> (i32, i32) {
    %c0_i32 = arith.constant 0 : i32
    %c0_i32_0 = arith.constant 0 : i32
    return %c0_i32, %arg1 : i32, i32
  }
  func.func @transform_3(%arg0: i32, %arg1: i32) -> (i32, i32) {
    %c0_i32 = arith.constant 0 : i32
    %c0_i32_0 = arith.constant 0 : i32
    return %c0_i32, %arg0 : i32, i32
  }
  func.func @transform_4(%arg0: i32, %arg1: i32) -> (i32, i32) {
    %c0_i32 = arith.constant 0 : i32
    %c0_i32_0 = arith.constant 0 : i32
    return %arg0, %c0_i32 : i32, i32
  }
}

</mosaic_0001>

<llo_original>
// kernel: tpu_custom_call.1
$region0: #{tpu_custom_call.1}
  #allocation0 [shape = 'u32[]', space=smem, size = 0x4, offset = 0x4, fixed_abs, tag = 'smem constant byte address 0x4 - core index']
  #allocation1 [shape = 'u32[72,128]{1,0:T(1,128)}', space=vmem, size = 0x9000, scoped, tag = 'internal scratch']
  #allocation2 [shape = 'f32[2,128]{1,0:T(2,128)}', space=vmem, size = 0x400, scoped, tag = 'scratch operand']
  %s0 = inlined_call_operand.vmem [shape: f32[128,1], index: 0, kind: input, shape index: {}]
  %s1 = inlined_call_operand.vmem [shape: f32[6,128], index: 1, kind: input, shape index: {}]
  %s2 = inlined_call_operand.vmem [shape: bf16[2,128], index: 2, kind: input, shape index: {}]
  %s3 = inlined_call_operand.hbm [shape: f32[2,128], index: 3, kind: output, shape index: {0}]
  %s4 = inlined_call_operand.hbm [shape: f32[8,128], index: 4, kind: output, shape index: {1}]
  %5 = xla_tuple %s3, %s4
  %s6 = sld [smem:[#allocation0]]
  $region38: #{tpu_custom_call.1} parent=0
    _
  %s8 = ssub.s32 1, %s6
  %s9 = scalar_select 0, %s8, %s6
  $region1: #{tpu_custom_call.1} parent=0
    #allocation3 [shape = 'u8[1024]{0}', space=vmem, size = 0x400, scoped, tag = 'output window, operand 0, single buffered']
    #allocation4 [shape = 's32[1]{0}', space=sflag, size = 0x4, scoped, tag = 'scoped memory for tpu_custom_call.1']
    #allocation5 [shape = 'u8[4096]{0}', space=vmem, size = 0x1000, scoped, tag = 'output window, operand 1, single buffered']
    #allocation6 [shape = 's32[1]{0}', space=sflag, size = 0x4, scoped, tag = 'scoped memory for tpu_custom_call.1']
    %10 = vsyncpa [#allocation4], 0
    %11 = vsyncpa [#allocation6], 0
    // Predicated region
    $region2: #{tpu_custom_call.1} parent=1 // pred_check
      _
    $region3: #{tpu_custom_call.1} parent=1 // pred_check_branch
      %13 = sbr.rel (0) target = $region5
    $region4: #{tpu_custom_call.1} parent=1 // pred_region
      _
    $region5: #{tpu_custom_call.1} parent=1 // pred_fallthru
      _
    // Predicated region
    $region6: #{tpu_custom_call.1} parent=1 // pred_check
      _
    $region7: #{tpu_custom_call.1} parent=1 // pred_check_branch
      %15 = sbr.rel (0) target = $region9
    $region8: #{tpu_custom_call.1} parent=1 // pred_region
      _
    $region9: #{tpu_custom_call.1} parent=1 // pred_fallthru
      _
    // Predicated region
    $region10: #{tpu_custom_call.1} parent=1 // pred_check
      _
    $region11: #{tpu_custom_call.1} parent=1 // pred_check_branch
      %17 = sbr.rel (0) target = $region13
    $region12: #{tpu_custom_call.1} parent=1 // pred_region
      _
    $region13: #{tpu_custom_call.1} parent=1 // pred_fallthru
      _
    %p18 = scmp.eq.s32.totalorder 0, 0
    // Predicated region
    $region14: #{tpu_custom_call.1} parent=1 // pred_check
      %p19 = pneg %p18
    $region15: #{tpu_custom_call.1} parent=1 // pred_check_branch
      %21 = sbr.rel (%p19) target = $region17
    $region16: #{tpu_custom_call.1} parent=1 // pred_region
      %22 = vst [vmem:[#allocation2] sm:$0x3] 0.0
    $region17: #{tpu_custom_call.1} parent=1 // pred_fallthru
      _
    %v23 = vld [vmem:[%s1] sm:$0x1]
    %v24 = vld [vmem:[%s0] sm:$0xff]
    %v25 = vld [vmem:[%s0 + $0x8] sm:$0xff]
    %v26 = vld [vmem:[%s0 + $0x10] sm:$0xff]
    %v27 = vld [vmem:[%s0 + $0x18] sm:$0xff]
    %v28 = vld [vmem:[%s0 + $0x20] sm:$0xff]
    %v29 = vld [vmem:[%s0 + $0x28] sm:$0xff]
    %v30 = vld [vmem:[%s0 + $0x30] sm:$0xff]
    %v31 = vld [vmem:[%s0 + $0x38] sm:$0xff]
    %v32 = vld [vmem:[%s0 + $0x40] sm:$0xff]
    %v33 = vld [vmem:[%s0 + $0x48] sm:$0xff]
    %v34 = vld [vmem:[%s0 + $0x50] sm:$0xff]
    %v35 = vld [vmem:[%s0 + $0x58] sm:$0xff]
    %v36 = vld [vmem:[%s0 + $0x60] sm:$0xff]
    %v37 = vld [vmem:[%s0 + $0x68] sm:$0xff]
    %v38 = vld [vmem:[%s0 + $0x70] sm:$0xff]
    %v39 = vld [vmem:[%s0 + $0x78] sm:$0xff]
    %v40 = vperm.slane %v23, 0
    %42 = vset.pattern.permute.xlu0 0
    %43 = vperm.xlu0 %42, %v24
    %v44 = vpop.permute.xlu0 %43
    %47 = vset.pattern.permute.xlu0 0
    %48 = vperm.xlu0 %47, %v25
    %v49 = vpop.permute.xlu0 %48
    %52 = vset.pattern.permute.xlu0 0
    %53 = vperm.xlu0 %52, %v26
    %v54 = vpop.permute.xlu0 %53
    %57 = vset.pattern.permute.xlu0 0
    %58 = vperm.xlu0 %57, %v27
    %v59 = vpop.permute.xlu0 %58
    %62 = vset.pattern.permute.xlu0 0
    %63 = vperm.xlu0 %62, %v28
    %v64 = vpop.permute.xlu0 %63
    %67 = vset.pattern.permute.xlu0 0
    %68 = vperm.xlu0 %67, %v29
    %v69 = vpop.permute.xlu0 %68
    %72 = vset.pattern.permute.xlu0 0
    %73 = vperm.xlu0 %72, %v30
    %v74 = vpop.permute.xlu0 %73
    %77 = vset.pattern.permute.xlu0 0
    %78 = vperm.xlu0 %77, %v31
    %v79 = vpop.permute.xlu0 %78
    %82 = vset.pattern.permute.xlu0 0
    %83 = vperm.xlu0 %82, %v32
    %v84 = vpop.permute.xlu0 %83
    %87 = vset.pattern.permute.xlu0 0
    %88 = vperm.xlu0 %87, %v33
    %v89 = vpop.permute.xlu0 %88
    %92 = vset.pattern.permute.xlu0 0
    %93 = vperm.xlu0 %92, %v34
    %v94 = vpop.permute.xlu0 %93
    %97 = vset.pattern.permute.xlu0 0
    %98 = vperm.xlu0 %97, %v35
    %v99 = vpop.permute.xlu0 %98
    %102 = vset.pattern.permute.xlu0 0
    %103 = vperm.xlu0 %102, %v36
    %v104 = vpop.permute.xlu0 %103
    %107 = vset.pattern.permute.xlu0 0
    %108 = vperm.xlu0 %107, %v37
    %v109 = vpop.permute.xlu0 %108
    %112 = vset.pattern.permute.xlu0 0
    %113 = vperm.xlu0 %112, %v38
    %v114 = vpop.permute.xlu0 %113
    %117 = vset.pattern.permute.xlu0 0
    %118 = vperm.xlu0 %117, %v39
    %v119 = vpop.permute.xlu0 %118
    %v121 = vsub.f32 %v40, %v44
    %v122 = vsub.f32 %v40, %v49
    %v123 = vsub.f32 %v40, %v54
    %v124 = vsub.f32 %v40, %v59
    %v125 = vsub.f32 %v40, %v64
    %v126 = vsub.f32 %v40, %v69
    %v127 = vsub.f32 %v40, %v74
    %v128 = vsub.f32 %v40, %v79
    %v129 = vsub.f32 %v40, %v84
    %v130 = vsub.f32 %v40, %v89
    %v131 = vsub.f32 %v40, %v94
    %v132 = vsub.f32 %v40, %v99
    %v133 = vsub.f32 %v40, %v104
    %v134 = vsub.f32 %v40, %v109
    %v135 = vsub.f32 %v40, %v114
    %v136 = vsub.f32 %v40, %v119
    %v137 = vsub.f32 1.0, %v121
    %v138 = vsub.f32 1.0, %v122
    %v139 = vsub.f32 1.0, %v123
    %v140 = vsub.f32 1.0, %v124
    %v141 = vsub.f32 1.0, %v125
    %v142 = vsub.f32 1.0, %v126
    %v143 = vsub.f32 1.0, %v127
    %v144 = vsub.f32 1.0, %v128
    %v145 = vsub.f32 1.0, %v129
    %v146 = vsub.f32 1.0, %v130
    %v147 = vsub.f32 1.0, %v131
    %v148 = vsub.f32 1.0, %v132
    %v149 = vsub.f32 1.0, %v133
    %v150 = vsub.f32 1.0, %v134
    %v151 = vsub.f32 1.0, %v135
    %v152 = vsub.f32 1.0, %v136
    %v153 = vmax.f32 %v137, 0.0
    %v154 = vmax.f32 %v138, 0.0
    %v155 = vmax.f32 %v139, 0.0
    %v156 = vmax.f32 %v140, 0.0
    %v157 = vmax.f32 %v141, 0.0
    %v158 = vmax.f32 %v142, 0.0
    %v159 = vmax.f32 %v143, 0.0
    %v160 = vmax.f32 %v144, 0.0
    %v161 = vmax.f32 %v145, 0.0
    %v162 = vmax.f32 %v146, 0.0
    %v163 = vmax.f32 %v147, 0.0
    %v164 = vmax.f32 %v148, 0.0
    %v165 = vmax.f32 %v149, 0.0
    %v166 = vmax.f32 %v150, 0.0
    %v167 = vmax.f32 %v151, 0.0
    %v168 = vmax.f32 %v152, 0.0
    %v169 = vmul.f32 %v153, %v153
    %v170 = vmul.f32 %v154, %v154
    %v171 = vmul.f32 %v155, %v155
    %v172 = vmul.f32 %v156, %v156
    %v173 = vmul.f32 %v157, %v157
    %v174 = vmul.f32 %v158, %v158
    %v175 = vmul.f32 %v159, %v159
    %v176 = vmul.f32 %v160, %v160
    %v177 = vmul.f32 %v161, %v161
    %v178 = vmul.f32 %v162, %v162
    %v179 = vmul.f32 %v163, %v163
    %v180 = vmul.f32 %v164, %v164
    %v181 = vmul.f32 %v165, %v165
    %v182 = vmul.f32 %v166, %v166
    %v183 = vmul.f32 %v167, %v167
    %v184 = vmul.f32 %v168, %v168
    %v185 = vld [vmem:[#allocation2] sm:$0x3]
    %v186 = vld [vmem:[%s2] sm:$0x1]
    %v187 = vpack.c.bf16 %v170, %v169
    %v188 = vpack.c.bf16 %v172, %v171
    %v189 = vpack.c.bf16 %v174, %v173
    %v190 = vpack.c.bf16 %v176, %v175
    %v191 = vpack.c.bf16 %v178, %v177
    %v192 = vpack.c.bf16 %v180, %v179
    %v193 = vpack.c.bf16 %v182, %v181
    %v194 = vpack.c.bf16 %v184, %v183
    %195 = vmatpush.bf16.msra.mxu0 %v194
    %196 = vmatpush.bf16.msra.mxu0 %v193
    %197 = vmatpush.bf16.msra.mxu0 %v192
    %198 = vmatpush.bf16.msra.mxu0 %v191
    %199 = vmatpush.bf16.msra.mxu0 %v190
    %200 = vmatpush.bf16.msra.mxu0 %v189
    %201 = vmatpush.bf16.msra.mxu0 %v188
    %202 = vmatpush.bf16.msra.mxu0 %v187
    %203 = vmatmul.bf16.gmra.mxu0 %v186
    %v204 = vpop.f32.mrf.mxu0
    %v205 = vadd.f32 0.0, %v204
    %v206 = vpop.f32.mrf.mxu0
    %207 = vdwg.mxu0
    %v208 = vadd.f32 %v185, %v205
    %209 = vst [vmem:[#allocation2] sm:$0x3] %v208
    // Predicated region
    $region18: #{tpu_custom_call.1} parent=1 // pred_check
      %p210 = pneg %p18
    $region19: #{tpu_custom_call.1} parent=1 // pred_check_branch
      %212 = sbr.rel (%p210) target = $region21
    $region20: #{tpu_custom_call.1} parent=1 // pred_region
      %v213 = vld [vmem:[%s1] sm:$0x1]
      %v214 = vld [vmem:[%s1 + $0x1] sm:$0x1]
      %v215 = vld [vmem:[%s1 + $0x2] sm:$0x1]
      %v216 = vld [vmem:[%s1 + $0x3] sm:$0x1]
      %v217 = vld [vmem:[%s1 + $0x4] sm:$0x1]
      %v218 = vld [vmem:[%s1 + $0x5] sm:$0x1]
      %v219 = vld [vmem:[#allocation2] sm:$0x1]
      %v220 = vld [vmem:[#allocation2 + $0x1] sm:$0x1]
      %v221 = vmul.f32 %v217, 0.1
      %v222 = vmul.f32 %v219, 0.0625
      %v223 = vmul.f32 %v222, 0.9
      %v224 = vadd.f32 %v221, %v223
      %v225 = vmul.f32 %v218, 0.1
      %v226 = vmul.f32 %v220, 0.0625
      %v227 = vmul.f32 %v226, 0.9
      %v228 = vadd.f32 %v225, %v227
      %229 = vst [vmem:[#allocation3] sm:$0x1] %v224
      %230 = vst [vmem:[#allocation3 + $0x1] sm:$0x1] %v228
      %v231 = vmul.f32 %v224, %v224
      %v232 = vmax.f32 %v231, 1e-30
      %v233 = vmul.f32 %v228, %v219
      %v234 = vmul.f32 %v224, %v220
      %v235 = vsub.f32 %v233, %v234
      %v236 = vmul.f32 %v215, %v235
      %v237 = vrcp.pop %v232
      %v238 = vmul.f32 %v232, %v237
      %v239 = vsub.f32 1.0, %v238
      %v240 = vmul.f32 %v237, %v239
      %v241 = vadd.f32 %v237, %v240
      %vm242 = vweird.f32 %v232
      %vm243 = vweird.f32 %v237
      %vm244 = vmor %vm242, %vm243
      %v245 = vsel %vm244, %v237, %v241
      %v246 = vand.u32 2147483647, %v232
      %vm247 = vcmp.eq.f32.partialorder %v246, 8.507059e+37
      %v248 = vand.u32 %v232, 2147483648
      %v249 = vor.u32 1.1754944e-38, %v248
      %v250 = vsel %vm247, %v249, %v245
      %v251 = vmul.f32 %v236, %v250
      %v252 = vsub.f32 1.0, %v213
      %vm253 = vcmp.gt.f32.partialorder %v213, 0.0
      %v254 = vsel %vm253, %v213, 1.0
      %vm255 = vcmp.gt.f32.partialorder %v252, 0.0
      %v256 = vsel %vm255, %v252, 1.0
      %v257 = vlog2.pop %v254
      %v258 = vmul.f32 %v257, 0.6931472
      %v259 = vadd.f32 %v214, 1e-12
      %v260 = vlog2.pop %v259
      %v261 = vmul.f32 %v260, 0.6931472
      %v262 = vsub.f32 %v258, %v261
      %v263 = vmul.f32 %v213, %v262
      %v264 = vlog2.pop %v256
      %v265 = vmul.f32 %v264, 0.6931472
      %v266 = vsub.f32 1.0, %v214
      %v267 = vadd.f32 %v266, 1e-12
      %v268 = vlog2.pop %v267
      %v269 = vmul.f32 %v268, 0.6931472
      %v270 = vsub.f32 %v265, %v269
      %v271 = vmul.f32 %v252, %v270
      %v272 = vadd.f32 %v263, %v271
      %v273 = vmul.f32 %v272, %v216
      %vm274 = vcmask 1040384
      %v275 = vsel %vm274, %v251, 0.0
      %276 = vadd.xlane.f32.xlu0 %v275
      %v277 = vpop.xlane.xlu0 %276
      %v278 = vsel %vm274, %v273, 0.0
      %279 = vadd.xlane.f32.xlu0 %v278
      %v280 = vpop.xlane.xlu0 %279
      %v281 = vsel %vm274, %v215, 0.0
      %282 = vadd.xlane.f32.xlu0 %v281
      %v283 = vpop.xlane.xlu0 %282
      %v284 = vlaneseq
      %v285 = vand.u32 %v284, 127
      %vm286 = vcmp.eq.s32.totalorder %v285, 0
      %v287 = vsel %vm286, %v277, 0.0
      %vm288 = vcmp.eq.s32.totalorder %v285, 1
      %v289 = vsel %vm288, %v280, 0.0
      %v290 = vadd.f32 %v287, %v289
      %vm291 = vcmp.eq.s32.totalorder %v285, 2
      %v292 = vsel %vm291, %v283, 0.0
      %v293 = vadd.f32 %v290, %v292
      %294 = vst [vmem:[#allocation5] sm:$0xff] 0.0
      %295 = vst [vmem:[#allocation5] sm:$0x1] %v293
    $region21: #{tpu_custom_call.1} parent=1 // pred_fallthru
      _
    // Predicated region
    $region22: #{tpu_custom_call.1} parent=1 // pred_check
      _
    $region23: #{tpu_custom_call.1} parent=1 // pred_check_branch
      %297 = sbr.rel (0) target = $region25
    $region24: #{tpu_custom_call.1} parent=1 // pred_region
      %299 = vsyncadd [#allocation4], 0
      %s301 = sshll.u32 [#allocation3], 4
      %s302 = int_to_ptr.vmem [resolvable:$true] %s301
      %s303 = sshll.u32 %s3, 4
      %s304 = int_to_ptr.hbm [resolvable:$true] %s303
      %306 = dma.vmem_to_hbm [thread:$0]  %s302, 32, %s304, [#allocation4]
    $region25: #{tpu_custom_call.1} parent=1 // pred_fallthru
      _
    // Predicated region
    $region26: #{tpu_custom_call.1} parent=1 // pred_check
      _
    $region27: #{tpu_custom_call.1} parent=1 // pred_check_branch
      %308 = sbr.rel (0) target = $region29
    $region28: #{tpu_custom_call.1} parent=1 // pred_region
      %310 = vsyncadd [#allocation6], 0
      %s312 = sshll.u32 [#allocation5], 4
      %s313 = int_to_ptr.vmem [resolvable:$true] %s312
      %s314 = sshll.u32 %s4, 4
      %s315 = int_to_ptr.hbm [resolvable:$true] %s314
      %317 = dma.vmem_to_hbm [thread:$0]  %s313, 128, %s315, [#allocation6]
    $region29: #{tpu_custom_call.1} parent=1 // pred_fallthru
      _
    // Predicated region
    $region30: #{tpu_custom_call.1} parent=1 // pred_check
      _
    $region31: #{tpu_custom_call.1} parent=1 // pred_check_branch
      %319 = sbr.rel (0) target = $region33
    $region32: #{tpu_custom_call.1} parent=1 // pred_region
      %321 = dma.done [#allocation4], 32
    $region33: #{tpu_custom_call.1} parent=1 // pred_fallthru
      _
    // Predicated region
    $region34: #{tpu_custom_call.1} parent=1 // pred_check
      _
    $region35: #{tpu_custom_call.1} parent=1 // pred_check_branch
      %323 = sbr.rel (0) target = $region37
    $region36: #{tpu_custom_call.1} parent=1 // pred_region
      %325 = dma.done [#allocation6], 128
    $region37: #{tpu_custom_call.1} parent=1 // pred_fallthru
      _
    %326 = vsyncpa [#allocation4], 1
    %327 = vsyncpa [#allocation6], 1

</llo_original>
